<compile_context>
chip_gen: v6e
topology: v6e:2x2x1
jax: 0.10.0
libtpu: 0.0.40
codegen_flags: <defaults>
</compile_context>

<pallas_src>
from functools import partial
from itertools import combinations

import numpy as np
import jax
import jax.numpy as jnp
from jax import lax
from jax.experimental import pallas as pl
from jax.experimental.pallas import tpu as pltpu

EPS = 1e-8  # matches torch cosine_similarity default eps
_VMEM_CAP = 56 << 20  # fits v7x's 64 MiB physical VMEM with headroom


# ----------------------------- Pallas kernel ------------------------------ #
def _triplet_hinge_kernel(lab_r_ref, lab_a_ref, e_all_ref, e_ancT_ref, out_ref,
                          sap_ref, san_ref, acc_ref, *, margin, ta, n_pad):
    i = pl.program_id(0)

    # Transposed cosine Gram block on the MXU (f32 accumulation, default precision):
    #   sT[r, a] = <e_all_normalized[r], e_anchor_normalized[a]>,  shape (n_pad, ta).
    # Rows r (the positive / negative axis) land on sublanes so the per-p slice
    # in the hot loop is a cheap dynamic sublane read.
    sT = jnp.dot(e_all_ref[...], e_ancT_ref[...],
                 preferred_element_type=jnp.float32)

    lab_r = lab_r_ref[...]            # (n_pad, 1) labels of all rows (pad = -1)
    lab_a = lab_a_ref[...]            # (1, ta)    labels of this anchor tile

    # AllTripletSelector as 2-D masks (folded directly into the similarity rows):
    #   positive pair (a, p): same label, p > a (global index), a valid
    #   negative n          : different label, both valid
    same = lab_r == lab_a                                        # (n_pad, ta)
    valid_a = lab_a >= 0                                         # (1, ta)
    valid_r = lab_r >= 0                                         # (n_pad, 1)
    r_glob = lax.broadcasted_iota(jnp.int32, (n_pad, ta), 0)
    a_glob = i * ta + lax.broadcasted_iota(jnp.int32, (n_pad, ta), 1)
    pos = same & (r_glob > a_glob) & valid_a                     # over (p, a)
    neg = jnp.logical_not(same) & valid_r & valid_a              # over (n, a)

    big = jnp.float32(1e30)
    sap_ref[...] = jnp.where(pos, sT, big)                       # masked positives -> +BIG
    san_ref[...] = jnp.where(neg, sT, -big) + margin             # margin folded once
    acc_ref[...] = jnp.zeros_like(acc_ref)

    # sum_{a,p,n} relu(S[a,n] - S[a,p] + margin) over valid (a,p,n):
    # VPU-only hot loop over p, accumulating into the (n_pad, ta) accumulator.
    # Positives require p > a_glob >= i*ta, so earlier p rows are skipped.
    @pl.loop(0, n_pad)
    def _(p):
        @pl.when(p > i * ta)
        def _():
            acc_ref[...] += jnp.maximum(san_ref[...] - sap_ref[pl.ds(p, 1), :], 0.0)

    # Single cross-lane reduce per tile; lane-dense (1, 1, 128) partial-sum block.
    out_ref[...] = jnp.zeros((1, 1, 128), jnp.float32) + jnp.sum(acc_ref[...])


# ------------------------------ wrapper ------------------------------------ #
def _round_up(x, m):
    return ((x + m - 1) // m) * m


def _preferred_anchor_tile():
    # 128 matches v5e's 128x128 MXU; 256 fills the 256-wide MXU on v6e/v7x.
    try:
        kind = jax.devices()[0].device_kind.lower()
    except Exception:
        kind = ""
    return 128 if "v5" in kind else 256


def _vmem_estimate_bytes(n_pad, d, ta):
    emb = 2 * (n_pad * d + d * ta) * 4      # double-buffered embedding blocks (f32)
    slabs = 7 * n_pad * ta * 4              # 3 scratch slabs + ~4 live temporaries
    labels = 4 * (n_pad + ta) * 4
    return emb + slabs + labels + (2 << 20)


def _choose_tiling(n, d):
    n8 = _round_up(max(n, 1), 8)
    ta = min(_preferred_anchor_tile(), n8)
    n_pad = _round_up(n, ta)
    if ta > 128 and _vmem_estimate_bytes(n_pad, d, ta) >= _VMEM_CAP:
        ta = 128
        n_pad = _round_up(n, ta)
    # TODO(synk): for extreme n*d (resident (n_pad, d) block alone near the VMEM
    # cap) the all-rows operand would additionally need K/N chunking; not needed
    # at batch sizes where this O(N^3)-triplet loss is tractable.
    return ta, n_pad


def _pallas_triplet_loss_sum(emb_all, emb_allT, lab_col, lab_row, margin, ta, n_pad):
    d = emb_all.shape[1]
    grid = n_pad // ta
    vmem_limit = int(min(max(_vmem_estimate_bytes(n_pad, d, ta), 4 << 20), _VMEM_CAP))

    kernel = partial(_triplet_hinge_kernel, margin=float(margin), ta=ta, n_pad=n_pad)
    partials = pl.pallas_call(
        kernel,
        out_shape=jax.ShapeDtypeStruct((grid, 1, 128), jnp.float32),
        grid_spec=pltpu.PrefetchScalarGridSpec(
            num_scalar_prefetch=0,
            grid=(grid,),
            in_specs=[
                pl.BlockSpec((n_pad, 1), lambda i: (0, 0)),   # labels, all rows (col)
                pl.BlockSpec((1, ta), lambda i: (0, i)),      # labels, anchor tile (row)
                pl.BlockSpec((n_pad, d), lambda i: (0, 0)),   # normalized rows, resident
                pl.BlockSpec((d, ta), lambda i: (0, i)),      # normalized anchors, pre-T
            ],
            out_specs=pl.BlockSpec((1, 1, 128), lambda i: (i, 0, 0)),
            scratch_shapes=[
                pltpu.VMEM((n_pad, ta), jnp.float32),   # masked s_ap
                pltpu.VMEM((n_pad, ta), jnp.float32),   # masked s_an + margin
                pltpu.VMEM((n_pad, ta), jnp.float32),   # hinge accumulator
            ],
        ),
        compiler_params=pltpu.CompilerParams(
            dimension_semantics=("parallel",),
            vmem_limit_bytes=vmem_limit),
    )(lab_col, lab_row, emb_all, emb_allT)
    return jnp.sum(partials[:, 0, 0])


def num_all_triplets(labels_np):
    """len(AllTripletSelector triplets) via label combinatorics (host glue)."""
    labels_np = np.asarray(labels_np)
    n = labels_np.shape[0]
    _, inv = np.unique(labels_np, return_inverse=True)
    counts = np.bincount(inv)
    return int(sum(int(c) * (int(c) - 1) // 2 * (n - int(c)) for c in counts))


def online_triplet_loss(embeddings, target, margin):
    """Forward pass. Returns (mean_loss, num_triplets)."""
    labels_np = np.asarray(target)
    n, d = embeddings.shape
    num_triplets = num_all_triplets(labels_np)
    if num_triplets == 0:
        # torch would take the mean of an empty tensor (NaN); guard instead.
        return jnp.float32(0.0), 0

    _, inv = np.unique(labels_np, return_inverse=True)   # remap labels to 0..K-1
    labels01 = inv.astype(np.int32)

    ta, n_pad = _choose_tiling(n, d)

    # L2-normalize ONCE outside the kernel (hoisted; padded zero rows stay zero).
    emb = jnp.asarray(embeddings, jnp.float32)
    nrm = jnp.sqrt(jnp.sum(emb * emb, axis=-1, keepdims=True))
    emb_n = emb / jnp.maximum(nrm, EPS)
    emb_pad = jnp.zeros((n_pad, d), jnp.float32).at[:n].set(emb_n)
    emb_pad_t = emb_pad.T                                  # (d, n_pad), one-time transpose

    lab_pad = np.full((n_pad,), -1, np.int32)              # -1 marks padded rows
    lab_pad[:n] = labels01
    lab_col = jnp.asarray(lab_pad.reshape(n_pad, 1))
    lab_row = jnp.asarray(lab_pad.reshape(1, n_pad))

    total = _pallas_triplet_loss_sum(emb_pad, emb_pad_t, lab_col, lab_row,
                                     margin, ta, n_pad)
    return total / num_triplets, num_triplets


class ASoftmax:
    """Interface parity with the PyTorch module (whose forward body is `pass`)."""

    def __init__(self, embedding_size, num_classes, margin):
        del embedding_size, num_classes
        self.margin = margin

    def __call__(self, embeddings, labels):
        return online_triplet_loss(embeddings, labels, self.margin)


# ------------------------------ reference ---------------------------------- #
def all_triplets(labels_np):
    """All (anchor, positive, negative) index triplets (AllTripletSelector)."""
    labels_np = np.asarray(labels_np)
    triplets = []
    for label in np.unique(labels_np):
        label_mask = labels_np == label
        label_idx = np.where(label_mask)[0]
        if len(label_idx) < 2:
            continue
        neg_idx = np.where(~label_mask)[0]
        for a, pos in combinations(label_idx, 2):
            for neg in neg_idx:
                triplets.append([a, pos, neg])
    return np.asarray(triplets, dtype=np.int32).reshape(-1, 3)


def _reference_loss(embeddings_np, target, margin):
    triplets = all_triplets(np.asarray(target))
    if triplets.shape[0] == 0:
        return np.float32(0.0), 0
    e = np.asarray(embeddings_np, np.float64)
    a, p, nn = e[triplets[:, 0]], e[triplets[:, 1]], e[triplets[:, 2]]
    ap = (a * p).sum(-1) / np.maximum(
        np.linalg.norm(a, axis=-1) * np.linalg.norm(p, axis=-1), EPS)
    an = (a * nn).sum(-1) / np.maximum(
        np.linalg.norm(a, axis=-1) * np.linalg.norm(nn, axis=-1), EPS)
    return np.maximum(an - ap + margin, 0.0).mean(), triplets.shape[0]


if __name__ == "__main__":
    key = jax.random.PRNGKey(0)
    N, D = 8, 32
    margin = 0.2
    embeddings = jax.random.normal(key, (N, D), dtype=jnp.float32)
    target = np.array([0, 0, 0, 0, 1, 1, 1, 1], dtype=np.int32)

    loss_fn = ASoftmax(embedding_size=D, num_classes=2, margin=margin)
    loss, n_triplets = loss_fn(embeddings, target)
    loss = jax.block_until_ready(loss)

    ref_loss, ref_n = _reference_loss(np.asarray(embeddings), target, margin)
    assert n_triplets == ref_n, (n_triplets, ref_n)
    # Tolerance relaxed vs the old Precision.HIGHEST version: the Gram matmul now
    # runs at default MXU precision (per perf review); f64 reference comparison.
    np.testing.assert_allclose(np.asarray(loss), np.asarray(ref_loss, np.float32),
                               rtol=5e-3, atol=1e-3)
    print("KERNEL_OK")
</pallas_src>

<mosaic_0001>
module attributes {stable_mosaic.version = 11 : i64} {
  func.func @_triplet_hinge_kernel(%arg0: i32, %arg1: memref<8x1xi32, #tpu.memory_space<vmem>>, %arg2: memref<1x8xi32, #tpu.memory_space<vmem>>, %arg3: memref<8x32xf32, #tpu.memory_space<vmem>>, %arg4: memref<32x8xf32, #tpu.memory_space<vmem>>, %arg5: memref<1x1x128xf32, #tpu.memory_space<vmem>>, %arg6: memref<8x8xf32, #tpu.memory_space<vmem>>, %arg7: memref<8x8xf32, #tpu.memory_space<vmem>>, %arg8: memref<8x8xf32, #tpu.memory_space<vmem>>) attributes {dimension_semantics = [#tpu.dimension_semantics<parallel>], iteration_bounds = array<i64: 1>, scalar_prefetch = 0 : i64, scratch_operands = 3 : i64, tpu.core_type = #tpu.core_type<tc>, window_params = [{pipeline_mode = #tpu.pipeline_mode<synchronous>, transform_indices = @transform_0, window_bounds = array<i64: 8, 1>}, {transform_indices = @transform_1, window_bounds = array<i64: 1, 8>}, {pipeline_mode = #tpu.pipeline_mode<synchronous>, transform_indices = @transform_2, window_bounds = array<i64: 8, 32>}, {transform_indices = @transform_3, window_bounds = array<i64: 32, 8>}, {transform_indices = @transform_4, window_bounds = array<i64: 1, 1, 128>}]} {
    %c0 = arith.constant 0 : index
    %c0_0 = arith.constant 0 : index
    %0 = vector.load %arg3[%c0, %c0_0] : memref<8x32xf32, #tpu.memory_space<vmem>>, vector<8x32xf32>
    %c0_1 = arith.constant 0 : index
    %c0_2 = arith.constant 0 : index
    %1 = vector.load %arg4[%c0_1, %c0_2] : memref<32x8xf32, #tpu.memory_space<vmem>>, vector<32x8xf32>
    %cst = arith.constant dense<0.000000e+00> : vector<8x8xf32>
    %2 = tpu.matmul %0, %1, %cst {dimension_numbers = #tpu.dot_dimension_numbers<[1], [0], [0], [1], [0, 0, 1, 1], [], []>} : vector<8x32xf32>, vector<32x8xf32>, vector<8x8xf32> -> vector<8x8xf32>
    %c0_3 = arith.constant 0 : index
    %c0_4 = arith.constant 0 : index
    %3 = vector.load %arg1[%c0_3, %c0_4] : memref<8x1xi32, #tpu.memory_space<vmem>>, vector<8x1xi32>
    %c0_5 = arith.constant 0 : index
    %c0_6 = arith.constant 0 : index
    %4 = vector.load %arg2[%c0_5, %c0_6] : memref<1x8xi32, #tpu.memory_space<vmem>>, vector<1x8xi32>
    %5 = vector.broadcast %3 : vector<8x1xi32> to vector<8x8xi32>
    %6 = vector.broadcast %4 : vector<1x8xi32> to vector<8x8xi32>
    %7 = arith.cmpi eq, %5, %6 : vector<8x8xi32>
    %c0_i32 = arith.constant 0 : i32
    %8 = vector.broadcast %c0_i32 : i32 to vector<1x8xi32>
    %9 = arith.cmpi sge, %4, %8 : vector<1x8xi32>
    %c0_i32_7 = arith.constant 0 : i32
    %10 = vector.broadcast %c0_i32_7 : i32 to vector<8x1xi32>
    %11 = arith.cmpi sge, %3, %10 : vector<8x1xi32>
    %12 = tpu.iota {dimensions = array<i32: 0>} : vector<8x8xi32>
    %c8_i32 = arith.constant 8 : i32
    %13 = arith.muli %arg0, %c8_i32 : i32
    %14 = tpu.iota {dimensions = array<i32: 1>} : vector<8x8xi32>
    %15 = vector.broadcast %13 : i32 to vector<8x8xi32>
    %16 = arith.addi %15, %14 : vector<8x8xi32>
    %17 = arith.cmpi sgt, %12, %16 : vector<8x8xi32>
    %18 = arith.andi %7, %17 : vector<8x8xi1>
    %19 = vector.broadcast %9 : vector<1x8xi1> to vector<8x8xi1>
    %20 = arith.andi %18, %19 : vector<8x8xi1>
    %cst_8 = arith.constant dense<true> : vector<8x8xi1>
    %21 = arith.xori %7, %cst_8 : vector<8x8xi1>
    %22 = vector.broadcast %11 : vector<8x1xi1> to vector<8x8xi1>
    %23 = arith.andi %21, %22 : vector<8x8xi1>
    %24 = vector.broadcast %9 : vector<1x8xi1> to vector<8x8xi1>
    %25 = arith.andi %23, %24 : vector<8x8xi1>
    %cst_9 = arith.constant 1.000000e+30 : f32
    %26 = vector.broadcast %cst_9 : f32 to vector<8x8xf32>
    %27 = arith.select %20, %2, %26 : vector<8x8xi1>, vector<8x8xf32>
    %c0_10 = arith.constant 0 : index
    %c0_11 = arith.constant 0 : index
    %28 = vector.load %arg6[%c0_10, %c0_11] : memref<8x8xf32, #tpu.memory_space<vmem>>, vector<8x8xf32>
    tpu.vector_store %arg6[%c0_10, %c0_11], %27 {strides = array<i32>} : memref<8x8xf32, #tpu.memory_space<vmem>>, vector<8x8xf32>,
    %cst_12 = arith.constant 0.000000e+00 : f32
    %cst_13 = arith.constant 1.000000e+30 : f32
    %29 = arith.subf %cst_12, %cst_13 : f32
    %30 = vector.broadcast %29 : f32 to vector<8x8xf32>
    %31 = arith.select %25, %2, %30 : vector<8x8xi1>, vector<8x8xf32>
    %cst_14 = arith.constant 2.000000e-01 : f32
    %32 = vector.broadcast %cst_14 : f32 to vector<8x8xf32>
    %33 = arith.addf %31, %32 : vector<8x8xf32>
    %c0_15 = arith.constant 0 : index
    %c0_16 = arith.constant 0 : index
    %34 = vector.load %arg7[%c0_15, %c0_16] : memref<8x8xf32, #tpu.memory_space<vmem>>, vector<8x8xf32>
    tpu.vector_store %arg7[%c0_15, %c0_16], %33 {strides = array<i32>} : memref<8x8xf32, #tpu.memory_space<vmem>>, vector<8x8xf32>,
    %cst_17 = arith.constant 0.000000e+00 : f32
    %35 = vector.broadcast %cst_17 : f32 to vector<8x8xf32>
    %c0_18 = arith.constant 0 : index
    %c0_19 = arith.constant 0 : index
    %36 = vector.load %arg8[%c0_18, %c0_19] : memref<8x8xf32, #tpu.memory_space<vmem>>, vector<8x8xf32>
    tpu.vector_store %arg8[%c0_18, %c0_19], %35 {strides = array<i32>} : memref<8x8xf32, #tpu.memory_space<vmem>>, vector<8x8xf32>,
    %c0_i32_20 = arith.constant 0 : i32
    %c8_i32_21 = arith.constant 8 : i32
    %37 = arith.addi %c0_i32_20, %c8_i32_21 : i32
    %c1_i32 = arith.constant 1 : i32
    scf.for %arg9 = %c0_i32_20 to %37 step %c1_i32  : i32 {
      %c1_i32_30 = arith.constant 1 : i32
      %47 = arith.muli %arg9, %c1_i32_30 : i32
      %c0_i32_31 = arith.constant 0 : i32
      %48 = arith.addi %c0_i32_31, %47 : i32
      %c8_i32_32 = arith.constant 8 : i32
      %49 = arith.muli %arg0, %c8_i32_32 : i32
      %50 = arith.cmpi sgt, %48, %49 : i32
      %51 = arith.extui %50 : i1 to i32
      %c0_i32_33 = arith.constant 0 : i32
      %52 = arith.cmpi ne, %51, %c0_i32_33 : i32
      scf.if %52 {
        %c0_34 = arith.constant 0 : index
        %c0_35 = arith.constant 0 : index
        %53 = vector.load %arg8[%c0_34, %c0_35] : memref<8x8xf32, #tpu.memory_space<vmem>>, vector<8x8xf32>
        %c0_36 = arith.constant 0 : index
        %c0_37 = arith.constant 0 : index
        %54 = vector.load %arg7[%c0_36, %c0_37] : memref<8x8xf32, #tpu.memory_space<vmem>>, vector<8x8xf32>
        %55 = arith.index_cast %48 : i32 to index
        %c0_38 = arith.constant 0 : index
        %56 = vector.load %arg6[%55, %c0_38] : memref<8x8xf32, #tpu.memory_space<vmem>>, vector<1x8xf32>
        %57 = vector.broadcast %56 : vector<1x8xf32> to vector<8x8xf32>
        %58 = arith.subf %54, %57 : vector<8x8xf32>
        %cst_39 = arith.constant 0.000000e+00 : f32
        %59 = vector.broadcast %cst_39 : f32 to vector<8x8xf32>
        %60 = arith.maximumf %58, %59 : vector<8x8xf32>
        %61 = arith.addf %53, %60 : vector<8x8xf32>
        %c0_40 = arith.constant 0 : index
        %c0_41 = arith.constant 0 : index
        %62 = vector.load %arg8[%c0_40, %c0_41] : memref<8x8xf32, #tpu.memory_space<vmem>>, vector<8x8xf32>
        tpu.vector_store %arg8[%c0_40, %c0_41], %61 {strides = array<i32>} : memref<8x8xf32, #tpu.memory_space<vmem>>, vector<8x8xf32>,
      } else {
      }
    }
    %c8_i32_22 = arith.constant 8 : i32
    %cst_23 = arith.constant 0.000000e+00 : f32
    %38 = vector.broadcast %cst_23 : f32 to vector<1x1x128xf32>
    %c0_24 = arith.constant 0 : index
    %c0_25 = arith.constant 0 : index
    %39 = vector.load %arg8[%c0_24, %c0_25] : memref<8x8xf32, #tpu.memory_space<vmem>>, vector<8x8xf32>
    %40 = vector.shape_cast %39 : vector<8x8xf32> to vector<1x8x8xf32>
    %cst_26 = arith.constant dense<0.000000e+00> : vector<1xf32>
    %41 = vector.multi_reduction <add>, %40, %cst_26 [1, 2] : vector<1x8x8xf32> to vector<1xf32>
    %42 = vector.shape_cast %41 : vector<1xf32> to vector<1x1x1xf32>
    %43 = vector.extract %42[0, 0, 0] : f32 from vector<1x1x1xf32>
    %44 = vector.broadcast %43 : f32 to vector<1x1x128xf32>
    %45 = arith.addf %38, %44 : vector<1x1x128xf32>
    %c0_27 = arith.constant 0 : index
    %c0_28 = arith.constant 0 : index
    %c0_29 = arith.constant 0 : index
    %46 = vector.load %arg5[%c0_27, %c0_28, %c0_29] : memref<1x1x128xf32, #tpu.memory_space<vmem>>, vector<1x1x128xf32>
    tpu.vector_store %arg5[%c0_27, %c0_28, %c0_29], %45 {strides = array<i32>} : memref<1x1x128xf32, #tpu.memory_space<vmem>>, vector<1x1x128xf32>,
    return
  }
  func.func @transform_0(%arg0: i32) -> (i32, i32) {
    %c0_i32 = arith.constant 0 : i32
    %c0_i32_0 = arith.constant 0 : i32
    %c0_i32_1 = arith.constant 0 : i32
    return %c0_i32, %c0_i32_0 : i32, i32
  }
  func.func @transform_1(%arg0: i32) -> (i32, i32) {
    %c0_i32 = arith.constant 0 : i32
    %c0_i32_0 = arith.constant 0 : i32
    return %c0_i32, %arg0 : i32, i32
  }
  func.func @transform_2(%arg0: i32) -> (i32, i32) {
    %c0_i32 = arith.constant 0 : i32
    %c0_i32_0 = arith.constant 0 : i32
    %c0_i32_1 = arith.constant 0 : i32
    return %c0_i32, %c0_i32_0 : i32, i32
  }
  func.func @transform_3(%arg0: i32) -> (i32, i32) {
    %c0_i32 = arith.constant 0 : i32
    %c0_i32_0 = arith.constant 0 : i32
    return %c0_i32, %arg0 : i32, i32
  }
  func.func @transform_4(%arg0: i32) -> (i32, i32, i32) {
    %c0_i32 = arith.constant 0 : i32
    %c0_i32_0 = arith.constant 0 : i32
    %c0_i32_1 = arith.constant 0 : i32
    return %arg0, %c0_i32, %c0_i32_0 : i32, i32, i32
  }
}

</mosaic_0001>

<llo_original>
// kernel: tpu_custom_call.1
$region0: #{tpu_custom_call.1}
  #allocation0 [shape = 'u32[]', space=smem, size = 0x4, offset = 0x4, fixed_abs, tag = 'smem constant byte address 0x4 - core index']
  #allocation1 [shape = 'u32[144,128]{1,0:T(1,128)}', space=vmem, size = 0x12000, scoped, tag = 'internal scratch']
  #allocation2 [shape = 'f32[8,8]{1,0:T(8,128)}', space=vmem, size = 0x1000, scoped, tag = 'scratch operand']
  #allocation3 [shape = 'f32[8,8]{1,0:T(8,128)}', space=vmem, size = 0x1000, scoped, tag = 'scratch operand']
  #allocation4 [shape = 'f32[8,8]{1,0:T(8,128)}', space=vmem, size = 0x1000, scoped, tag = 'scratch operand']
  %s0 = inlined_call_operand.vmem [shape: s32[8,1], index: 0, kind: input, shape index: {}]
  %s1 = inlined_call_operand.vmem [shape: s32[1,8], index: 1, kind: input, shape index: {}]
  %s2 = inlined_call_operand.vmem [shape: f32[8,32], index: 2, kind: input, shape index: {}]
  %s3 = inlined_call_operand.vmem [shape: f32[32,8], index: 3, kind: input, shape index: {}]
  %s4 = inlined_call_operand.hbm [shape: f32[1,1,128], index: 4, kind: output, shape index: {}]
  %s5 = sld [smem:[#allocation0]]
  $region37: #{tpu_custom_call.1} parent=0
    _
  %s7 = ssub.s32 1, %s5
  %s8 = scalar_select 0, %s7, %s5
  $region1: #{tpu_custom_call.1} parent=0
    #allocation5 [shape = 'u8[512]{0}', space=vmem, size = 0x400, scoped, tag = 'output window, operand 0, single buffered']
    #allocation6 [shape = 's32[1]{0}', space=sflag, size = 0x4, scoped, tag = 'scoped memory for tpu_custom_call.1']
    %9 = vsyncpa [#allocation6], 0
    // Predicated region
    $region2: #{tpu_custom_call.1} parent=1 // pred_check
      _
    $region3: #{tpu_custom_call.1} parent=1 // pred_check_branch
      %11 = sbr.rel (0) target = $region5
    $region4: #{tpu_custom_call.1} parent=1 // pred_region
      _
    $region5: #{tpu_custom_call.1} parent=1 // pred_fallthru
      _
    // Predicated region
    $region6: #{tpu_custom_call.1} parent=1 // pred_check
      _
    $region7: #{tpu_custom_call.1} parent=1 // pred_check_branch
      %13 = sbr.rel (0) target = $region9
    $region8: #{tpu_custom_call.1} parent=1 // pred_region
      _
    $region9: #{tpu_custom_call.1} parent=1 // pred_fallthru
      _
    // Predicated region
    $region10: #{tpu_custom_call.1} parent=1 // pred_check
      _
    $region11: #{tpu_custom_call.1} parent=1 // pred_check_branch
      %15 = sbr.rel (0) target = $region13
    $region12: #{tpu_custom_call.1} parent=1 // pred_region
      _
    $region13: #{tpu_custom_call.1} parent=1 // pred_fallthru
      _
    // Predicated region
    $region14: #{tpu_custom_call.1} parent=1 // pred_check
      _
    $region15: #{tpu_custom_call.1} parent=1 // pred_check_branch
      %17 = sbr.rel (0) target = $region17
    $region16: #{tpu_custom_call.1} parent=1 // pred_region
      _
    $region17: #{tpu_custom_call.1} parent=1 // pred_fallthru
      _
    %v18 = vld [vmem:[%s2] sm:$0xff]
    %v19 = vld [vmem:[%s3] sm:$0xff]
    %v20 = vld [vmem:[%s3 + $0x8] sm:$0xff]
    %v21 = vld [vmem:[%s3 + $0x10] sm:$0xff]
    %v22 = vld [vmem:[%s3 + $0x18] sm:$0xff]
    %vm23 = vcmask 261120
    %v25 = vsel %vm23, %v18, 0
    %27 = vmatprep.subr.mxu0 0.0
    %28 = vmatpush1.msra.mxu0 0.0
    %29 = vmatprep.subr.mxu0 0.0
    %30 = vmatpush1.msra.mxu0 0.0
    %31 = vmatprep.subr.mxu0 0.0
    %32 = vmatpush1.msra.mxu0 0.0
    %33 = vmatprep.subr.mxu0 0.0
    %34 = vmatpush1.msra.mxu0 0.0
    %35 = vmatprep.subr.mxu0 0.0
    %36 = vmatpush1.msra.mxu0 0.0
    %37 = vmatprep.subr.mxu0 0.0
    %38 = vmatpush1.msra.mxu0 0.0
    %39 = vmatprep.subr.mxu0 0.0
    %40 = vmatpush1.msra.mxu0 0.0
    %41 = vmatprep.subr.mxu0 0.0
    %42 = vmatpush1.msra.mxu0 0.0
    %43 = vmatprep.subr.mxu0 0.0
    %44 = vmatpush1.msra.mxu0 0.0
    %45 = vmatprep.subr.mxu0 0.0
    %46 = vmatpush1.msra.mxu0 0.0
    %47 = vmatprep.subr.mxu0 0.0
    %48 = vmatpush1.msra.mxu0 0.0
    %49 = vmatprep.subr.mxu0 0.0
    %50 = vmatpush1.msra.mxu0 0.0
    %51 = vmatprep.subr.mxu0 0.0
    %52 = vmatpush1.msra.mxu0 %v22
    %53 = vmatprep.subr.mxu0 0.0
    %54 = vmatpush1.msra.mxu0 %v21
    %55 = vmatprep.subr.mxu0 0.0
    %56 = vmatpush1.msra.mxu0 %v20
    %57 = vmatprep.subr.mxu0 0.0
    %58 = vmatpush1.msra.mxu0 %v19
    %59 = vmatprep.subr.mxu0 0.0
    %60 = vmatpush2.msra.mxu0 0.0
    %61 = vmatprep.subr.mxu0 0.0
    %62 = vmatpush2.msra.mxu0 0.0
    %63 = vmatprep.subr.mxu0 0.0
    %64 = vmatpush2.msra.mxu0 0.0
    %65 = vmatprep.subr.mxu0 0.0
    %66 = vmatpush2.msra.mxu0 0.0
    %67 = vmatprep.subr.mxu0 0.0
    %68 = vmatpush2.msra.mxu0 0.0
    %69 = vmatprep.subr.mxu0 0.0
    %70 = vmatpush2.msra.mxu0 0.0
    %71 = vmatprep.subr.mxu0 0.0
    %72 = vmatpush2.msra.mxu0 0.0
    %73 = vmatprep.subr.mxu0 0.0
    %74 = vmatpush2.msra.mxu0 0.0
    %75 = vmatprep.subr.mxu0 0.0
    %76 = vmatpush2.msra.mxu0 0.0
    %77 = vmatprep.subr.mxu0 0.0
    %78 = vmatpush2.msra.mxu0 0.0
    %79 = vmatprep.subr.mxu0 0.0
    %80 = vmatpush2.msra.mxu0 0.0
    %81 = vmatprep.subr.mxu0 0.0
    %82 = vmatpush2.msra.mxu0 0.0
    %83 = vmatprep.subr.mxu0 0.0
    %84 = vmatpush2.msra.mxu0 0.0
    %85 = vmatprep.subr.mxu0 0.0
    %86 = vmatpush2.msra.mxu0 0.0
    %87 = vmatprep.subr.mxu0 0.0
    %88 = vmatpush2.msra.mxu0 0.0
    %89 = vmatprep.subr.mxu0 0.0
    %90 = vmatpush2.msra.mxu0 0.0
    %91 = vmatprep.mubr.f32.mxu0 0.0
    %92 = vmatmul.mubr.f32.gmra.mxu0 %v25
    %v93 = vpop.f32.mrf.mxu0
    %v94 = vadd.f32 0.0, %v93
    %v95 = vpop.f32.mrf.mxu0
    %96 = vdwg.mxu0
    %v97 = vld [vmem:[%s0] sm:$0xff]
    %v98 = vld [vmem:[%s1] sm:$0x1]
    %99 = vset.pattern.permute.xlu0 0
    %100 = vperm.xlu0 %99, %v97
    %v101 = vpop.permute.xlu0 %100
    %v102 = vlaneseq
    %v103 = vshrl.u32 %v102, 7
    %v104 = vsub.s32 0, %v103
    %v105 = vrot.slane %v98, %v104
    %vm106 = vcmp.eq.s32.totalorder %v101, %v105
    %vm107 = vcmp.ge.s32.totalorder %v98, 0
    %vm108 = vcmp.ge.s32.totalorder %v97, 0
    %v109 = vlaneseq
    %v110 = vshrl.u32 %v109, 7
    %s111 = smul.u32 0, 8
    %v112 = vlaneseq
    %v113 = vand.u32 %v112, 127
    %v114 = vstv %s111
    %v115 = vadd.s32 %v114, %v113
    %vm116 = vcmp.gt.s32.totalorder %v110, %v115
    %vm117 = vmand %vm106, %vm116
    %v118 = vsel %vm107, 1, 0
    %v119 = vlaneseq
    %v120 = vshrl.u32 %v119, 7
    %v121 = vsub.s32 0, %v120
    %v122 = vrot.slane %v118, %v121
    %vm123 = vcmp.eq.s32.totalorder %v122, 1
    %vm124 = vmand %vm117, %vm123
    %vm125 = vmxor %vm106, 1
    %v126 = vsel %vm108, 1, 0
    %127 = vset.pattern.permute.xlu0 0
    %128 = vperm.xlu0 %127, %v126
    %v129 = vpop.permute.xlu0 %128
    %vm130 = vcmp.eq.s32.totalorder %v129, 1
    %vm131 = vmand %vm125, %vm130
    %vm132 = vmand %vm131, %vm123
    %v133 = vsel %vm124, %v94, 1e+30
    %vm134 = vcmask 64512
    %135 = vst.msk [vmem:[#allocation2] sm:$0xff] %vm134, %v133
    %v136 = vsel %vm132, %v94, -1e+30
    %v137 = vadd.f32 %v136, 0.2
    %138 = vst.msk [vmem:[#allocation3] sm:$0xff] %vm134, %v137
    %139 = vst.msk [vmem:[#allocation4] sm:$0xff] %vm134, 0.0
    loop: start=0, step=1, limit=8
    $region18: #{tpu_custom_call.1} parent=1 // loop_pre_header
      _
    $region19: #{tpu_custom_call.1} parent=1 // loop_header
      %s141 = sphi 0, %s145
      %p142 = scmp.ge.s32.totalorder %s141, 8
    $region20: #{tpu_custom_call.1} parent=1 // loop_header_branch
      %144 = sbr.rel (%p142) target = $region24
    $region21: #{tpu_custom_call.1} parent=1 // loop_body
      %p146 = scmp.gt.s32.totalorder %s141, %s111
      // Predicated region
      $region25: #{tpu_custom_call.1} parent=21 // pred_check
        %p147 = pneg %p146
      $region26: #{tpu_custom_call.1} parent=21 // pred_check_branch
        %149 = sbr.rel (%p147) target = $region28
      $region27: #{tpu_custom_call.1} parent=21 // pred_region
        %v150 = vld [vmem:[#allocation4] sm:$0xff]
        %v151 = vld [vmem:[#allocation3] sm:$0xff]
        %s152 = scalar_lea.vmem [#allocation2], %s141
        %v153 = vld [vmem:[%s152] sm:$0x1]
        %v154 = vlaneseq
        %v155 = vshrl.u32 %v154, 7
        %v156 = vsub.s32 0, %v155
        %v157 = vrot.slane %v153, %v156
        %v158 = vsub.f32 %v151, %v157
        %v159 = vmax.f32 %v158, 0.0
        %v160 = vadd.f32 %v150, %v159
        %161 = vst.msk [vmem:[#allocation4] sm:$0xff] %vm134, %v160
      $region28: #{tpu_custom_call.1} parent=21 // pred_fallthru
        _
    $region22: #{tpu_custom_call.1} parent=1 // loop_footer
      %s145 = sadd.s32 1, %s141
    $region23: #{tpu_custom_call.1} parent=1 // loop_footer_branch
      %140 = sbr.rel target = $region19
    $region24: #{tpu_custom_call.1} parent=1 // loop_exit
      _
    %v162 = vld [vmem:[#allocation4] sm:$0xff]
    %v163 = vsel %vm134, %v162, 0.0
    %164 = vadd.xlane.f32.xlu0 %v163
    %v165 = vpop.xlane.xlu0 %164
    %v166 = vrot.slane %v165, 4
    %v167 = vadd.f32 %v165, %v166
    %v168 = vrot.slane %v167, 2
    %v169 = vadd.f32 %v167, %v168
    %v170 = vrot.slane %v169, 1
    %v171 = vadd.f32 %v169, %v170
    %s172 = vtos %v171
    %v173 = vstv %s172
    %v174 = vadd.f32 %v173, 0.0
    %175 = vst [vmem:[#allocation5] sm:$0x1] %v174
    // Predicated region
    $region29: #{tpu_custom_call.1} parent=1 // pred_check
      _
    $region30: #{tpu_custom_call.1} parent=1 // pred_check_branch
      %177 = sbr.rel (0) target = $region32
    $region31: #{tpu_custom_call.1} parent=1 // pred_region
      %s179 = ssub.s32 16, 16
      %180 = vsyncadd [#allocation6], %s179
      %s182 = sshll.u32 [#allocation5], 4
      %s183 = int_to_ptr.vmem [resolvable:$true] %s182
      %185 = dma.vmem_to_hbm [thread:$0]  %s183, 16, %s4, [#allocation6]
    $region32: #{tpu_custom_call.1} parent=1 // pred_fallthru
      _
    // Predicated region
    $region33: #{tpu_custom_call.1} parent=1 // pred_check
      _
    $region34: #{tpu_custom_call.1} parent=1 // pred_check_branch
      %187 = sbr.rel (0) target = $region36
    $region35: #{tpu_custom_call.1} parent=1 // pred_region
      %188 = dma.done [#allocation6], 16
    $region36: #{tpu_custom_call.1} parent=1 // pred_fallthru
      _
    %189 = vsyncpa [#allocation6], 1

</llo_original>
